<compile_context>
chip_gen: v7x
topology: tpu7x:2x2x1
jax: 0.10.0
libtpu: 0.0.40
codegen_flags: <defaults>
</compile_context>

<pallas_src>
import functools

import jax
import jax.numpy as jnp
from jax.experimental import pallas as pl
from jax.experimental.pallas import tpu as pltpu


_RESIDENT_W_MAX_BYTES = 4 * 1024 * 1024    # bf16 W^T kept fully resident below this
_VMEM_BUDGET_BYTES = 12 * 1024 * 1024      # fits default scoped-VMEM on v5e/v6e/v7x


def _round_up(x, m):
    return ((x + m - 1) // m) * m


def _plan_fc(num_features, num_classes):
    """Feature/class padding + tiling plan (independent of the batch)."""
    f_pad = _round_up(num_features, 128)
    c_pad = _round_up(num_classes, 128)
    resident = (c_pad <= 512) and (f_pad * c_pad * 2 <= _RESIDENT_W_MAX_BYTES)
    if resident:
        tk, tn = f_pad, c_pad
    else:
        # Choose tiles that divide the padded dims exactly (128 always divides).
        tk = f_pad if f_pad <= 1024 else next(
            c for c in (1024, 512, 256, 128) if f_pad % c == 0)
        tn = c_pad if c_pad <= 512 else next(
            c for c in (512, 256, 128) if c_pad % c == 0)
    return resident, tk, tn, f_pad, c_pad


def _plan_tm(batch, resident, f_pad, c_pad, tk, tn):
    """Pick the M tile: big, multiple of 16 (bf16 packing), bounded padding
    waste, VMEM-budgeted, and >=2 tiles when possible (v7x megacore)."""
    b16 = _round_up(batch, 16)
    waste_limit = max(15, batch // 8)
    tm = 16
    for c in (512, 256, 128, 64, 32, 16):
        if c <= b16 and _round_up(batch, c) - batch <= waste_limit:
            tm = c
            break

    def fits(tm_):
        if resident:
            fp = (2 * f_pad * c_pad * 2      # resident bf16 W^T (counted 2x, conservative)
                  + 2 * tm_ * f_pad * 2      # x tiles (bf16, double-buffered)
                  + 2 * tm_ * c_pad * 4      # out tiles (f32, double-buffered)
                  + 2 * c_pad * 4)           # bias
        else:
            fp = (2 * (tm_ * tk * 2 + tk * tn * 2 + tm_ * tn * 4)
                  + tm_ * tn * 4             # f32 accumulator scratch
                  + 2 * tn * 4)
        return fp <= _VMEM_BUDGET_BYTES

    while tm > 16 and not fits(tm):
        tm //= 2
    # Keep at least 2 M tiles so ("parallel", ...) can shard across v7x's 2 TCs.
    while tm > 16 and pl.cdiv(batch, tm) < 2:
        tm //= 2

    b_pad = _round_up(batch, tm)
    return tm, b_pad


def _linear_resident_kernel(x_ref, wt_ref, b_ref, o_ref):
    """Grid = (M tiles,). W^T and bias are VMEM-resident (constant index_map)."""
    acc = jnp.dot(x_ref[...], wt_ref[...], preferred_element_type=jnp.float32)
    o_ref[...] = (acc + b_ref[...]).astype(o_ref.dtype)


def _linear_tiled_kernel(x_ref, wt_ref, b_ref, o_ref, acc_ref):
    """Fallback for large weights. Grid = (M, N, K); K (reduction) last."""
    k = pl.program_id(2)

    @pl.when(k == 0)
    def _():
        acc_ref[...] = jnp.zeros_like(acc_ref)

    acc_ref[...] += jnp.dot(
        x_ref[...], wt_ref[...], preferred_element_type=jnp.float32
    )

    @pl.when(k == pl.num_programs(2) - 1)
    def _():
        o_ref[...] = (acc_ref[...] + b_ref[...]).astype(o_ref.dtype)


def prepare_params(weight, bias):
    """One-time layout prep (NOT per forward call).

    weight [C, F] (PyTorch nn.Linear layout) -> transposed, zero-padded,
    bf16 [F_pad, C_pad]; bias [C] -> f32 [1, C_pad].
    """
    num_classes, num_features = weight.shape
    _, _, _, f_pad, c_pad = _plan_fc(num_features, num_classes)
    wt = jnp.pad(weight.T, ((0, f_pad - num_features), (0, c_pad - num_classes)))
    wt = wt.astype(jnp.bfloat16)
    b2 = jnp.pad(
        bias.reshape(1, num_classes).astype(jnp.float32),
        ((0, 0), (0, c_pad - num_classes)),
    )
    return wt, b2


@functools.partial(jax.jit, static_argnums=(3,))
def logistic_regression_forward(x, wt_pad, bias_pad, num_classes):
    """x: [B, F] float32; wt_pad: bf16 [F_pad, C_pad]; bias_pad: f32 [1, C_pad]."""
    batch, num_features = x.shape
    resident, tk, tn, f_pad, c_pad = _plan_fc(num_features, num_classes)
    tm, b_padded = _plan_tm(batch, resident, f_pad, c_pad, tk, tn)

    assert wt_pad.shape == (f_pad, c_pad) and wt_pad.dtype == jnp.bfloat16, \
        "weight not prepared with prepare_params"
    assert bias_pad.shape == (1, c_pad), "bias not prepared with prepare_params"

    out_dtype = x.dtype
    xp = x.astype(jnp.bfloat16)  # bf16 stream -> half the HBM bytes
    # Pad only when actually needed (no extra HBM pass when B % tm == 0 and
    # F % 128 == 0). The feature (K) axis must stay zero-padded for correctness.
    if b_padded != batch or f_pad != num_features:
        xp = jnp.pad(xp, ((0, b_padded - batch), (0, f_pad - num_features)))

    if resident:
        out = pl.pallas_call(
            _linear_resident_kernel,
            out_shape=jax.ShapeDtypeStruct((b_padded, c_pad), out_dtype),
            grid=(b_padded // tm,),
            in_specs=[
                pl.BlockSpec((tm, f_pad), lambda i: (i, 0)),        # x tile (streams)
                pl.BlockSpec((f_pad, c_pad), lambda i: (0, 0)),     # W^T, fetched once
                pl.BlockSpec((1, c_pad), lambda i: (0, 0)),         # bias, fetched once
            ],
            out_specs=pl.BlockSpec((tm, c_pad), lambda i: (i, 0)),
            compiler_params=pltpu.CompilerParams(
                dimension_semantics=("parallel",),
            ),
        )(xp, wt_pad, bias_pad)
    else:
        grid = (b_padded // tm, c_pad // tn, f_pad // tk)
        out = pl.pallas_call(
            _linear_tiled_kernel,
            out_shape=jax.ShapeDtypeStruct((b_padded, c_pad), out_dtype),
            grid=grid,
            in_specs=[
                pl.BlockSpec((tm, tk), lambda i, j, k: (i, k)),     # x tile
                pl.BlockSpec((tk, tn), lambda i, j, k: (k, j)),     # W^T tile
                pl.BlockSpec((1, tn), lambda i, j, k: (0, j)),      # bias tile
            ],
            out_specs=pl.BlockSpec((tm, tn), lambda i, j, k: (i, j)),
            scratch_shapes=[pltpu.VMEM((tm, tn), jnp.float32)],
            compiler_params=pltpu.CompilerParams(
                dimension_semantics=("parallel", "parallel", "arbitrary"),
            ),
        )(xp, wt_pad, bias_pad)

    return out[:batch, :num_classes]


def init_params(key, num_features, num_classes):
    """xavier_uniform_ weight (as in the PyTorch module) + PyTorch-default
    uniform(-1/sqrt(F), 1/sqrt(F)) bias, in the PyTorch [C, F] / [C] layout."""
    kw, kb = jax.random.split(key)
    bound_w = (6.0 / (num_features + num_classes)) ** 0.5
    weight = jax.random.uniform(
        kw, (num_classes, num_features), jnp.float32, -bound_w, bound_w
    )
    bound_b = 1.0 / (num_features ** 0.5)
    bias = jax.random.uniform(kb, (num_classes,), jnp.float32, -bound_b, bound_b)
    return weight, bias


if __name__ == "__main__":
    key = jax.random.PRNGKey(0)
    k_x, k_p = jax.random.split(key)

    batch = 16
    num_features = 32
    num_classes = 8

    x = jax.random.normal(k_x, (batch, num_features), jnp.float32)
    weight, bias = init_params(k_p, num_features, num_classes)

    # One-time parameter layout prep (transpose + pad + bf16 cast).
    wt_pad, bias_pad = prepare_params(weight, bias)

    z = logistic_regression_forward(x, wt_pad, bias_pad, num_classes)
    jax.block_until_ready(z)

    # Correctness check against plain-JAX f32 reference of the PyTorch forward.
    z_ref = x @ weight.T + bias
    assert z.shape == (batch, num_classes)
    assert z.dtype == x.dtype
    # bf16 inputs / f32 accumulation: loose-ish elementwise tolerance.
    assert jnp.allclose(z, z_ref, atol=5e-2, rtol=5e-2)

    print("KERNEL_OK")
</pallas_src>

<mosaic_0001>
module attributes {stable_mosaic.version = 11 : i64} {
  func.func @_linear_resident_kernel(%arg0: i32, %arg1: memref<16x128xbf16, #tpu.memory_space<vmem>>, %arg2: memref<128x128xbf16, #tpu.memory_space<vmem>>, %arg3: memref<1x128xf32, #tpu.memory_space<vmem>>, %arg4: memref<16x128xf32, #tpu.memory_space<vmem>>) attributes {dimension_semantics = [#tpu.dimension_semantics<parallel>], iteration_bounds = array<i64: 1>, scalar_prefetch = 0 : i64, scratch_operands = 0 : i64, tpu.core_type = #tpu.core_type<tc>, window_params = [{transform_indices = @transform_0, window_bounds = array<i64: 16, 128>}, {pipeline_mode = #tpu.pipeline_mode<synchronous>, transform_indices = @transform_1, window_bounds = array<i64: 128, 128>}, {pipeline_mode = #tpu.pipeline_mode<synchronous>, transform_indices = @transform_2, window_bounds = array<i64: 1, 128>}, {transform_indices = @transform_3, window_bounds = array<i64: 16, 128>}]} {
    %c0 = arith.constant 0 : index
    %c0_0 = arith.constant 0 : index
    %0 = vector.load %arg1[%c0, %c0_0] : memref<16x128xbf16, #tpu.memory_space<vmem>>, vector<16x128xbf16>
    %c0_1 = arith.constant 0 : index
    %c0_2 = arith.constant 0 : index
    %1 = vector.load %arg2[%c0_1, %c0_2] : memref<128x128xbf16, #tpu.memory_space<vmem>>, vector<128x128xbf16>
    %cst = arith.constant dense<0.000000e+00> : vector<16x128xf32>
    %2 = tpu.matmul %0, %1, %cst {dimension_numbers = #tpu.dot_dimension_numbers<[1], [0], [0], [1], [0, 0, 1, 1], [], []>} : vector<16x128xbf16>, vector<128x128xbf16>, vector<16x128xf32> -> vector<16x128xf32>
    %c0_3 = arith.constant 0 : index
    %c0_4 = arith.constant 0 : index
    %3 = vector.load %arg3[%c0_3, %c0_4] : memref<1x128xf32, #tpu.memory_space<vmem>>, vector<1x128xf32>
    %4 = vector.broadcast %3 : vector<1x128xf32> to vector<16x128xf32>
    %5 = arith.addf %2, %4 : vector<16x128xf32>
    %c0_5 = arith.constant 0 : index
    %c0_6 = arith.constant 0 : index
    %6 = vector.load %arg4[%c0_5, %c0_6] : memref<16x128xf32, #tpu.memory_space<vmem>>, vector<16x128xf32>
    tpu.vector_store %arg4[%c0_5, %c0_6], %5 {strides = array<i32>} : memref<16x128xf32, #tpu.memory_space<vmem>>, vector<16x128xf32>,
    return
  }
  func.func @transform_0(%arg0: i32) -> (i32, i32) {
    %c0_i32 = arith.constant 0 : i32
    %c0_i32_0 = arith.constant 0 : i32
    return %arg0, %c0_i32 : i32, i32
  }
  func.func @transform_1(%arg0: i32) -> (i32, i32) {
    %c0_i32 = arith.constant 0 : i32
    %c0_i32_0 = arith.constant 0 : i32
    %c0_i32_1 = arith.constant 0 : i32
    return %c0_i32, %c0_i32_0 : i32, i32
  }
  func.func @transform_2(%arg0: i32) -> (i32, i32) {
    %c0_i32 = arith.constant 0 : i32
    %c0_i32_0 = arith.constant 0 : i32
    %c0_i32_1 = arith.constant 0 : i32
    return %c0_i32, %c0_i32_0 : i32, i32
  }
  func.func @transform_3(%arg0: i32) -> (i32, i32) {
    %c0_i32 = arith.constant 0 : i32
    %c0_i32_0 = arith.constant 0 : i32
    return %arg0, %c0_i32 : i32, i32
  }
}

</mosaic_0001>

<llo_original>
// kernel: logistic_regression_forward.1
$region0: #{logistic_regression_forward.1}
  #allocation0 [shape = 'u32[]', space=smem, size = 0x4, offset = 0x4, fixed_abs, tag = 'smem constant byte address 0x4 - core index']
  #allocation1 [shape = 'u32[144,128]{1,0:T(1,128)}', space=vmem, size = 0x12000, scoped, tag = 'internal scratch']
  %s0 = inlined_call_operand.vmem [shape: bf16[16,128], index: 0, kind: input, shape index: {}]
  %s1 = inlined_call_operand.hbm [shape: bf16[128,128], index: 1, kind: input, shape index: {}]
  %s2 = inlined_call_operand.vmem [shape: f32[1,128], index: 2, kind: input, shape index: {}]
  %s3 = inlined_call_operand.vmem [shape: f32[16,128], index: 3, kind: output, shape index: {}]
  %s4 = sld [smem:[#allocation0]]
  $region26: #{logistic_regression_forward.1} parent=0
    _
  %s6 = ssub.s32 1, %s4
  %s7 = scalar_select 0, %s6, %s4
  $region1: #{logistic_regression_forward.1} parent=0
    #allocation2 [shape = 'u8[32768]{0}', space=vmem, size = 0x8000, scoped, tag = 'input window, operand 1, single buffered']
    #allocation3 [shape = 's32[1]{0}', space=sflag, size = 0x4, scoped, tag = 'scoped memory for logistic_regression_forward.1']
    %8 = vsyncpa [#allocation3], 0
    // Predicated region
    $region2: #{logistic_regression_forward.1} parent=1 // pred_check
      _
    $region3: #{logistic_regression_forward.1} parent=1 // pred_check_branch
      %10 = sbr.rel (0) target = $region5
    $region4: #{logistic_regression_forward.1} parent=1 // pred_region
      _
    $region5: #{logistic_regression_forward.1} parent=1 // pred_fallthru
      _
    // Predicated region
    $region6: #{logistic_regression_forward.1} parent=1 // pred_check
      _
    $region7: #{logistic_regression_forward.1} parent=1 // pred_check_branch
      %12 = sbr.rel (0) target = $region9
    $region8: #{logistic_regression_forward.1} parent=1 // pred_region
      %s14 = ssub.s32 1024, 1024
      %15 = vsyncadd [#allocation3], %s14
      %s16 = sshll.u32 [#allocation2], 4
      %s17 = int_to_ptr.vmem [resolvable:$true] %s16
      %22 = dma.hbm_to_vmem [thread:$0]  %s1, 1024, %s17, [#allocation3], 64, 64, 4
    $region9: #{logistic_regression_forward.1} parent=1 // pred_fallthru
      _
    // Predicated region
    $region10: #{logistic_regression_forward.1} parent=1 // pred_check
      _
    $region11: #{logistic_regression_forward.1} parent=1 // pred_check_branch
      %24 = sbr.rel (0) target = $region13
    $region12: #{logistic_regression_forward.1} parent=1 // pred_region
      _
    $region13: #{logistic_regression_forward.1} parent=1 // pred_fallthru
      _
    // Predicated region
    $region14: #{logistic_regression_forward.1} parent=1 // pred_check
      _
    $region15: #{logistic_regression_forward.1} parent=1 // pred_check_branch
      %26 = sbr.rel (0) target = $region17
    $region16: #{logistic_regression_forward.1} parent=1 // pred_region
      %27 = dma.done [#allocation3], 1024
    $region17: #{logistic_regression_forward.1} parent=1 // pred_fallthru
      _
    %v29 = vld [vmem:[%s0] sm:$0xf]
    %v30 = vld [vmem:[%s0 + $0x4] sm:$0xf]
    %v31 = vld [vmem:[#allocation2] sm:$0xf]
    %v32 = vld [vmem:[#allocation2 + $0x4] sm:$0xf]
    %v33 = vld [vmem:[#allocation2 + $0x8] sm:$0xf]
    %v34 = vld [vmem:[#allocation2 + $0xc] sm:$0xf]
    %v35 = vld [vmem:[#allocation2 + $0x10] sm:$0xf]
    %v36 = vld [vmem:[#allocation2 + $0x14] sm:$0xf]
    %v37 = vld [vmem:[#allocation2 + $0x18] sm:$0xf]
    %v38 = vld [vmem:[#allocation2 + $0x1c] sm:$0xf]
    %v39 = vld [vmem:[#allocation2 + $0x20] sm:$0xf]
    %v40 = vld [vmem:[#allocation2 + $0x24] sm:$0xf]
    %v41 = vld [vmem:[#allocation2 + $0x28] sm:$0xf]
    %v42 = vld [vmem:[#allocation2 + $0x2c] sm:$0xf]
    %v43 = vld [vmem:[#allocation2 + $0x30] sm:$0xf]
    %v44 = vld [vmem:[#allocation2 + $0x34] sm:$0xf]
    %v45 = vld [vmem:[#allocation2 + $0x38] sm:$0xf]
    %v46 = vld [vmem:[#allocation2 + $0x3c] sm:$0xf]
    %v47 = vld [vmem:[%s2] sm:$0x1]
    %v49 = vlaneseq
    %v50 = vshrl.u32 %v49, 7
    %v51 = vsub.s32 0, %v50
    %v52 = vrot.slane %v47, %v51
    %v56 = vunpack.c.l.b16 %v29
    %v57 = vunpack.c.l.b16 %v30
    %v58 = vpack.c.b16 %v57, %v56
    %v76 = vunpack.c.l.b16 %v31
    %v77 = vunpack.c.l.b16 %v32
    %v78 = vunpack.c.l.b16 %v33
    %v79 = vunpack.c.l.b16 %v34
    %v80 = vunpack.c.l.b16 %v35
    %v81 = vunpack.c.l.b16 %v36
    %v82 = vunpack.c.l.b16 %v37
    %v83 = vunpack.c.l.b16 %v38
    %v84 = vunpack.c.l.b16 %v39
    %v85 = vunpack.c.l.b16 %v40
    %v86 = vunpack.c.l.b16 %v41
    %v87 = vunpack.c.l.b16 %v42
    %v88 = vunpack.c.l.b16 %v43
    %v89 = vunpack.c.l.b16 %v44
    %v90 = vunpack.c.l.b16 %v45
    %v91 = vunpack.c.l.b16 %v46
    %v92 = vpack.c.b16 %v77, %v76
    %v93 = vpack.c.b16 %v79, %v78
    %v94 = vpack.c.b16 %v81, %v80
    %v95 = vpack.c.b16 %v83, %v82
    %v96 = vpack.c.b16 %v85, %v84
    %v97 = vpack.c.b16 %v87, %v86
    %v98 = vpack.c.b16 %v89, %v88
    %v99 = vpack.c.b16 %v91, %v90
    %108 = vmatprep.subr.bf16.mxu0 0
    %109 = vmatpush1.bf16.msra.mxu0 %v92
    %110 = vmatprep.subr.bf16.mxu0 0
    %111 = vmatpush1.bf16.msra.mxu0 %v93
    %112 = vmatprep.subr.bf16.mxu0 0
    %113 = vmatpush1.bf16.msra.mxu0 %v94
    %114 = vmatprep.subr.bf16.mxu0 0
    %115 = vmatpush1.bf16.msra.mxu0 %v95
    %116 = vmatprep.subr.bf16.mxu0 0
    %117 = vmatpush1.bf16.msra.mxu0 %v96
    %118 = vmatprep.subr.bf16.mxu0 0
    %119 = vmatpush1.bf16.msra.mxu0 %v97
    %120 = vmatprep.subr.bf16.mxu0 0
    %121 = vmatpush1.bf16.msra.mxu0 %v98
    %122 = vmatprep.subr.bf16.mxu0 0
    %123 = vmatpush1.bf16.msra.mxu0 %v99
    %124 = vmatprep.subr.bf16.mxu0 0
    %125 = vmatpush1.bf16.msra.mxu0 0
    %126 = vmatprep.subr.bf16.mxu0 0
    %127 = vmatpush1.bf16.msra.mxu0 0
    %128 = vmatprep.subr.bf16.mxu0 0
    %129 = vmatpush1.bf16.msra.mxu0 0
    %130 = vmatprep.subr.bf16.mxu0 0
    %131 = vmatpush1.bf16.msra.mxu0 0
    %132 = vmatprep.subr.bf16.mxu0 0
    %133 = vmatpush1.bf16.msra.mxu0 0
    %134 = vmatprep.subr.bf16.mxu0 0
    %135 = vmatpush1.bf16.msra.mxu0 0
    %136 = vmatprep.subr.bf16.mxu0 0
    %137 = vmatpush1.bf16.msra.mxu0 0
    %138 = vmatprep.subr.bf16.mxu0 0
    %139 = vmatpush1.bf16.msra.mxu0 0
    %140 = vmatprep.mubr.bf16.mxu0 0
    %141 = vmatmul.mubr.bf16.gmra.mrb[0].mxu0 %v58
    %v142 = vpop.f32.mrb[0].mxu0
    %v143 = vadd.f32 %v52, %v142
    %v144 = vpop.f32.mrb[0].mxu0
    %v145 = vpop.f32.mrb[0].mxu0
    %v146 = vadd.f32 %v52, %v145
    %v147 = vpop.f32.mrb[0].mxu0
    %148 = vdwg.mxu0
    %149 = vst [vmem:[%s3] sm:$0xff] %v143
    %150 = vst [vmem:[%s3 + $0x8] sm:$0xff] %v146
    // Predicated region
    $region18: #{logistic_regression_forward.1} parent=1 // pred_check
      _
    $region19: #{logistic_regression_forward.1} parent=1 // pred_check_branch
      %152 = sbr.rel (0) target = $region21
    $region20: #{logistic_regression_forward.1} parent=1 // pred_region
      _
    $region21: #{logistic_regression_forward.1} parent=1 // pred_fallthru
      _
    // Predicated region
    $region22: #{logistic_regression_forward.1} parent=1 // pred_check
      _
    $region23: #{logistic_regression_forward.1} parent=1 // pred_check_branch
      %154 = sbr.rel (0) target = $region25
    $region24: #{logistic_regression_forward.1} parent=1 // pred_region
      _
    $region25: #{logistic_regression_forward.1} parent=1 // pred_fallthru
      _
    %155 = vsyncpa [#allocation3], 1

</llo_original>
